<compile_context>
chip_gen: v6e
topology: v6e:2x2x1
jax: 0.10.0
libtpu: 0.0.40
codegen_flags: <defaults>
</compile_context>

<pallas_src>
import functools

import jax
import jax.numpy as jnp
from jax.experimental import pallas as pl
from jax.experimental.pallas import tpu as pltpu


def _round_up(x, m):
    return ((x + m - 1) // m) * m


def _rep_spec(shape):
    zeros = (0,) * len(shape)
    return pl.BlockSpec(shape, lambda i: zeros)


def rnn_kernel(obs_ref, h_ref,
               w1_ref, b1_ref,
               wrz_ref, brz_ref,
               wn_ref, bn_ref,
               w2_ref, b2_ref,
               q_ref, h_out_ref,
               *, hp):
    obs = obs_ref[...]                                   # (Bt, Dinp) bf16
    h = h_ref[...]                                       # (Bt, Hp)   bf16

    # fc1 + ReLU (bf16 operands, f32 accumulate).
    x_f32 = jnp.dot(obs, w1_ref[...],
                    preferred_element_type=jnp.float32) + b1_ref[...]
    x = jnp.maximum(x_f32, 0.0).astype(jnp.bfloat16)     # (Bt, Hp) bf16

    # GRUCell: fused K=2*Hp projections on xh = [x | h].
    xh = jnp.concatenate([x, h], axis=1)                 # (Bt, 2*Hp) bf16

    # g_rz[:, 0:hp]   = i_r + h_r (+ combined bias)
    # g_rz[:, hp:2hp] = i_z + h_z (+ combined bias)
    g_rz = jnp.dot(xh, wrz_ref[...],
                   preferred_element_type=jnp.float32) + brz_ref[...]
    # g_n[:, 0:hp] = i_n + b_ih_n ; g_n[:, hp:2hp] = h_n + b_hh_n
    g_n = jnp.dot(xh, wn_ref[...],
                  preferred_element_type=jnp.float32) + bn_ref[...]

    r = jax.nn.sigmoid(g_rz[:, 0:hp])
    z = jax.nn.sigmoid(g_rz[:, hp:2 * hp])
    n = jnp.tanh(g_n[:, 0:hp] + r * g_n[:, hp:2 * hp])
    h_new = (1.0 - z) * n + z * h.astype(jnp.float32)    # (Bt, Hp) f32

    # fc2 (lane-dense output, padded to >=128 lanes).
    q = jnp.dot(h_new.astype(jnp.bfloat16), w2_ref[...],
                preferred_element_type=jnp.float32) + b2_ref[...]

    q_ref[...] = q.astype(q_ref.dtype)
    h_out_ref[...] = h_new.astype(h_out_ref.dtype)


def prepare_params(params, *, input_shape, rnn_hidden_dim, num_actions):
    """Pad / pack weights ONCE.  Gate order in W_ih/W_hh columns is [r|z|n]."""
    H = rnn_hidden_dim
    hp = _round_up(H, 128)
    ap = _round_up(num_actions, 128)
    dinp = _round_up(input_shape, 8)
    f32 = jnp.float32

    def pad2(w, rows, cols):
        return jnp.pad(w.astype(f32),
                       ((0, rows - w.shape[0]), (0, cols - w.shape[1])))

    w1 = pad2(params["W_fc1"], dinp, hp)
    b1 = jnp.pad(params["b_fc1"].astype(f32), ((0, hp - H),)).reshape(1, hp)

    W_ih = params["W_ih"].astype(f32)     # (H, 3H)
    W_hh = params["W_hh"].astype(f32)     # (H, 3H)
    b_ih = params["b_ih"].astype(f32)
    b_hh = params["b_hh"].astype(f32)

    # r/z: stack input & hidden weights along K so one matmul on [x|h] yields
    # the summed pre-activations directly.
    w_rz = jnp.zeros((2 * hp, 2 * hp), f32)
    b_rz = jnp.zeros((1, 2 * hp), f32)
    for g, col in ((0, 0), (1, hp)):                       # r -> 0, z -> hp
        w_rz = w_rz.at[:H, col:col + H].set(W_ih[:, g * H:(g + 1) * H])
        w_rz = w_rz.at[hp:hp + H, col:col + H].set(W_hh[:, g * H:(g + 1) * H])
        b_rz = b_rz.at[0, col:col + H].set(
            b_ih[g * H:(g + 1) * H] + b_hh[g * H:(g + 1) * H])

    # n: block-diagonal so i_n and h_n stay separate (needed for r * h_n).
    w_n = jnp.zeros((2 * hp, 2 * hp), f32)
    b_n = jnp.zeros((1, 2 * hp), f32)
    w_n = w_n.at[:H, :H].set(W_ih[:, 2 * H:3 * H])
    w_n = w_n.at[hp:hp + H, hp:hp + H].set(W_hh[:, 2 * H:3 * H])
    b_n = b_n.at[0, :H].set(b_ih[2 * H:3 * H])
    b_n = b_n.at[0, hp:hp + H].set(b_hh[2 * H:3 * H])

    w2 = pad2(params["W_fc2"], hp, ap)
    b2 = jnp.pad(params["b_fc2"].astype(f32),
                 ((0, ap - num_actions),)).reshape(1, ap)

    bf16 = jnp.bfloat16
    return dict(w1=w1.astype(bf16), b1=b1,
                w_rz=w_rz.astype(bf16), b_rz=b_rz,
                w_n=w_n.astype(bf16), b_n=b_n,
                w2=w2.astype(bf16), b2=b2)


@functools.partial(jax.jit,
                   static_argnames=("rnn_hidden_dim", "num_actions", "block_b"))
def rnn_forward(obs, hidden_state, packed, *, rnn_hidden_dim, num_actions,
                block_b=1024):
    H = rnn_hidden_dim
    hp = _round_up(H, 128)
    ap = _round_up(num_actions, 128)

    obs2 = obs.reshape(-1, obs.shape[-1])
    h_in = hidden_state.reshape(-1, H)
    b, din = obs2.shape
    dinp = _round_up(din, 8)

    # >=2 blocks whenever the batch allows (both v7x TCs busy); cap the block
    # so the per-block working set stays inside v7x's 64 MiB VMEM.
    half = _round_up(max(1, (b + 1) // 2), 8)
    blk = max(8, min(block_b, half, 2048))
    bp = _round_up(b, blk)
    grid = (bp // blk,)

    # Pad + cast activations to bf16 (single fused copy under jit).
    obs_p = jnp.pad(obs2.astype(jnp.bfloat16), ((0, bp - b), (0, dinp - din)))
    h_p = jnp.pad(h_in.astype(jnp.bfloat16), ((0, bp - b), (0, hp - H)))

    kernel = functools.partial(rnn_kernel, hp=hp)

    in_specs = [
        pl.BlockSpec((blk, dinp), lambda i: (i, 0)),
        pl.BlockSpec((blk, hp), lambda i: (i, 0)),
        _rep_spec(packed["w1"].shape), _rep_spec(packed["b1"].shape),
        _rep_spec(packed["w_rz"].shape), _rep_spec(packed["b_rz"].shape),
        _rep_spec(packed["w_n"].shape), _rep_spec(packed["b_n"].shape),
        _rep_spec(packed["w2"].shape), _rep_spec(packed["b2"].shape),
    ]
    out_specs = [
        pl.BlockSpec((blk, ap), lambda i: (i, 0)),
        pl.BlockSpec((blk, hp), lambda i: (i, 0)),
    ]
    out_shape = [
        jax.ShapeDtypeStruct((bp, ap), jnp.float32),
        jax.ShapeDtypeStruct((bp, hp), jnp.bfloat16),
    ]

    q_pad, h_pad = pl.pallas_call(
        kernel,
        out_shape=out_shape,
        grid=grid,
        in_specs=in_specs,
        out_specs=out_specs,
        # Hidden state updates in place in its padded bf16 HBM buffer.
        input_output_aliases={1: 1},
        compiler_params=pltpu.CompilerParams(
            dimension_semantics=("parallel",)),
    )(obs_p, h_p, packed["w1"], packed["b1"], packed["w_rz"], packed["b_rz"],
      packed["w_n"], packed["b_n"], packed["w2"], packed["b2"])

    q = q_pad[:b, :num_actions]
    h_new = h_pad[:b, :H].astype(jnp.float32)
    return q, h_new


def rnn_reference(obs, hidden_state, params, *, rnn_hidden_dim, num_actions):
    obs2 = obs.reshape(-1, obs.shape[-1]).astype(jnp.float32)
    h = hidden_state.reshape(-1, rnn_hidden_dim).astype(jnp.float32)
    x = jax.nn.relu(obs2 @ params["W_fc1"] + params["b_fc1"])
    gi = x @ params["W_ih"] + params["b_ih"]
    gh = h @ params["W_hh"] + params["b_hh"]
    H = rnn_hidden_dim
    i_r, i_z, i_n = gi[:, :H], gi[:, H:2 * H], gi[:, 2 * H:]
    h_r, h_z, h_n = gh[:, :H], gh[:, H:2 * H], gh[:, 2 * H:]
    r = jax.nn.sigmoid(i_r + h_r)
    z = jax.nn.sigmoid(i_z + h_z)
    n = jnp.tanh(i_n + r * h_n)
    h_new = (1.0 - z) * n + z * h
    q = h_new @ params["W_fc2"] + params["b_fc2"]
    return q, h_new


if __name__ == "__main__":
    episode_num, n_agents = 3, 8
    input_shape = 30
    rnn_hidden_dim = 64
    num_actions = 9
    B = episode_num * n_agents  # 24

    key = jax.random.PRNGKey(0)
    keys = jax.random.split(key, 10)

    def init(k, shape, scale=0.1):
        return (scale * jax.random.normal(k, shape)).astype(jnp.float32)

    params = dict(
        W_fc1=init(keys[0], (input_shape, rnn_hidden_dim)),
        b_fc1=init(keys[1], (rnn_hidden_dim,)),
        W_ih=init(keys[2], (rnn_hidden_dim, 3 * rnn_hidden_dim)),
        b_ih=init(keys[3], (3 * rnn_hidden_dim,)),
        W_hh=init(keys[4], (rnn_hidden_dim, 3 * rnn_hidden_dim)),
        b_hh=init(keys[5], (3 * rnn_hidden_dim,)),
        W_fc2=init(keys[6], (rnn_hidden_dim, num_actions)),
        b_fc2=init(keys[7], (num_actions,)),
    )

    obs = init(keys[8], (B, input_shape), scale=1.0)
    hidden_state = init(keys[9], (episode_num, n_agents, rnn_hidden_dim),
                        scale=1.0)

    # Pack / pad weights ONCE (not per forward call).
    packed = prepare_params(params, input_shape=input_shape,
                            rnn_hidden_dim=rnn_hidden_dim,
                            num_actions=num_actions)

    q, h = rnn_forward(obs, hidden_state, packed,
                       rnn_hidden_dim=rnn_hidden_dim, num_actions=num_actions)
    q = jax.block_until_ready(q)
    h = jax.block_until_ready(h)

    q_ref, h_ref = rnn_reference(obs, hidden_state, params,
                                 rnn_hidden_dim=rnn_hidden_dim,
                                 num_actions=num_actions)
    assert q.shape == (B, num_actions), q.shape
    assert h.shape == (B, rnn_hidden_dim), h.shape
    # bf16 matmul operands (f32 accumulation) -> loosened tolerance.
    assert jnp.allclose(q, q_ref, atol=3e-2, rtol=3e-2), \
        float(jnp.max(jnp.abs(q - q_ref)))
    assert jnp.allclose(h, h_ref, atol=3e-2, rtol=3e-2), \
        float(jnp.max(jnp.abs(h - h_ref)))
    print("KERNEL_OK")
</pallas_src>

<mosaic_0001>
module attributes {stable_mosaic.version = 11 : i64} {
  func.func @rnn_kernel(%arg0: i32, %arg1: memref<16x32xbf16, #tpu.memory_space<vmem>>, %arg2: memref<16x128xbf16, #tpu.memory_space<vmem>>, %arg3: memref<32x128xbf16, #tpu.memory_space<vmem>>, %arg4: memref<1x128xf32, #tpu.memory_space<vmem>>, %arg5: memref<256x256xbf16, #tpu.memory_space<vmem>>, %arg6: memref<1x256xf32, #tpu.memory_space<vmem>>, %arg7: memref<256x256xbf16, #tpu.memory_space<vmem>>, %arg8: memref<1x256xf32, #tpu.memory_space<vmem>>, %arg9: memref<128x128xbf16, #tpu.memory_space<vmem>>, %arg10: memref<1x128xf32, #tpu.memory_space<vmem>>, %arg11: memref<16x128xf32, #tpu.memory_space<vmem>>, %arg12: memref<16x128xbf16, #tpu.memory_space<vmem>>) attributes {dimension_semantics = [#tpu.dimension_semantics<parallel>], iteration_bounds = array<i64: 2>, scalar_prefetch = 0 : i64, scratch_operands = 0 : i64, tpu.core_type = #tpu.core_type<tc>, window_params = [{transform_indices = @transform_0, window_bounds = array<i64: 16, 32>}, {transform_indices = @transform_1, window_bounds = array<i64: 16, 128>}, {pipeline_mode = #tpu.pipeline_mode<synchronous>, transform_indices = @transform_2, window_bounds = array<i64: 32, 128>}, {pipeline_mode = #tpu.pipeline_mode<synchronous>, transform_indices = @transform_3, window_bounds = array<i64: 1, 128>}, {pipeline_mode = #tpu.pipeline_mode<synchronous>, transform_indices = @transform_4, window_bounds = array<i64: 256, 256>}, {pipeline_mode = #tpu.pipeline_mode<synchronous>, transform_indices = @transform_5, window_bounds = array<i64: 1, 256>}, {pipeline_mode = #tpu.pipeline_mode<synchronous>, transform_indices = @transform_6, window_bounds = array<i64: 256, 256>}, {pipeline_mode = #tpu.pipeline_mode<synchronous>, transform_indices = @transform_7, window_bounds = array<i64: 1, 256>}, {pipeline_mode = #tpu.pipeline_mode<synchronous>, transform_indices = @transform_8, window_bounds = array<i64: 128, 128>}, {pipeline_mode = #tpu.pipeline_mode<synchronous>, transform_indices = @transform_9, window_bounds = array<i64: 1, 128>}, {transform_indices = @transform_10, window_bounds = array<i64: 16, 128>}, {transform_indices = @transform_11, window_bounds = array<i64: 16, 128>}]} {
    %c0 = arith.constant 0 : index
    %c0_0 = arith.constant 0 : index
    %0 = vector.load %arg1[%c0, %c0_0] : memref<16x32xbf16, #tpu.memory_space<vmem>>, vector<16x32xbf16>
    %c0_1 = arith.constant 0 : index
    %c0_2 = arith.constant 0 : index
    %1 = vector.load %arg2[%c0_1, %c0_2] : memref<16x128xbf16, #tpu.memory_space<vmem>>, vector<16x128xbf16>
    %c0_3 = arith.constant 0 : index
    %c0_4 = arith.constant 0 : index
    %2 = vector.load %arg3[%c0_3, %c0_4] : memref<32x128xbf16, #tpu.memory_space<vmem>>, vector<32x128xbf16>
    %cst = arith.constant dense<0.000000e+00> : vector<16x128xf32>
    %3 = tpu.matmul %0, %2, %cst {dimension_numbers = #tpu.dot_dimension_numbers<[1], [0], [0], [1], [0, 0, 1, 1], [], []>} : vector<16x32xbf16>, vector<32x128xbf16>, vector<16x128xf32> -> vector<16x128xf32>
    %c0_5 = arith.constant 0 : index
    %c0_6 = arith.constant 0 : index
    %4 = vector.load %arg4[%c0_5, %c0_6] : memref<1x128xf32, #tpu.memory_space<vmem>>, vector<1x128xf32>
    %5 = vector.broadcast %4 : vector<1x128xf32> to vector<16x128xf32>
    %6 = arith.addf %3, %5 : vector<16x128xf32>
    %cst_7 = arith.constant 0.000000e+00 : f32
    %7 = vector.broadcast %cst_7 : f32 to vector<16x128xf32>
    %8 = arith.maximumf %6, %7 : vector<16x128xf32>
    %9 = arith.truncf %8 : vector<16x128xf32> to vector<16x128xbf16>
    %10 = tpu.concatenate %9, %1 in 1 : vector<16x128xbf16>, vector<16x128xbf16> -> vector<16x256xbf16>
    %c0_8 = arith.constant 0 : index
    %c0_9 = arith.constant 0 : index
    %11 = vector.load %arg5[%c0_8, %c0_9] : memref<256x256xbf16, #tpu.memory_space<vmem>>, vector<256x256xbf16>
    %cst_10 = arith.constant dense<0.000000e+00> : vector<16x256xf32>
    %12 = tpu.matmul %10, %11, %cst_10 {dimension_numbers = #tpu.dot_dimension_numbers<[1], [0], [0], [1], [0, 0, 1, 1], [], []>} : vector<16x256xbf16>, vector<256x256xbf16>, vector<16x256xf32> -> vector<16x256xf32>
    %c0_11 = arith.constant 0 : index
    %c0_12 = arith.constant 0 : index
    %13 = vector.load %arg6[%c0_11, %c0_12] : memref<1x256xf32, #tpu.memory_space<vmem>>, vector<1x256xf32>
    %14 = vector.broadcast %13 : vector<1x256xf32> to vector<16x256xf32>
    %15 = arith.addf %12, %14 : vector<16x256xf32>
    %c0_13 = arith.constant 0 : index
    %c0_14 = arith.constant 0 : index
    %16 = vector.load %arg7[%c0_13, %c0_14] : memref<256x256xbf16, #tpu.memory_space<vmem>>, vector<256x256xbf16>
    %cst_15 = arith.constant dense<0.000000e+00> : vector<16x256xf32>
    %17 = tpu.matmul %10, %16, %cst_15 {dimension_numbers = #tpu.dot_dimension_numbers<[1], [0], [0], [1], [0, 0, 1, 1], [], []>} : vector<16x256xbf16>, vector<256x256xbf16>, vector<16x256xf32> -> vector<16x256xf32>
    %c0_16 = arith.constant 0 : index
    %c0_17 = arith.constant 0 : index
    %18 = vector.load %arg8[%c0_16, %c0_17] : memref<1x256xf32, #tpu.memory_space<vmem>>, vector<1x256xf32>
    %19 = vector.broadcast %18 : vector<1x256xf32> to vector<16x256xf32>
    %20 = arith.addf %17, %19 : vector<16x256xf32>
    %21 = vector.extract_strided_slice %15 {offsets = [0, 0], sizes = [16, 128], strides = [1, 1]} : vector<16x256xf32> to vector<16x128xf32>
    %22 = arith.negf %21 : vector<16x128xf32>
    %23 = math.exp %22 : vector<16x128xf32>
    %cst_18 = arith.constant 1.000000e+00 : f32
    %24 = vector.broadcast %cst_18 : f32 to vector<16x128xf32>
    %25 = arith.addf %24, %23 : vector<16x128xf32>
    %26 = arith.divf %24, %25 : vector<16x128xf32>
    %27 = vector.extract_strided_slice %15 {offsets = [0, 128], sizes = [16, 128], strides = [1, 1]} : vector<16x256xf32> to vector<16x128xf32>
    %28 = arith.negf %27 : vector<16x128xf32>
    %29 = math.exp %28 : vector<16x128xf32>
    %cst_19 = arith.constant 1.000000e+00 : f32
    %30 = vector.broadcast %cst_19 : f32 to vector<16x128xf32>
    %31 = arith.addf %30, %29 : vector<16x128xf32>
    %32 = arith.divf %30, %31 : vector<16x128xf32>
    %33 = vector.extract_strided_slice %20 {offsets = [0, 0], sizes = [16, 128], strides = [1, 1]} : vector<16x256xf32> to vector<16x128xf32>
    %34 = vector.extract_strided_slice %20 {offsets = [0, 128], sizes = [16, 128], strides = [1, 1]} : vector<16x256xf32> to vector<16x128xf32>
    %35 = arith.mulf %26, %34 : vector<16x128xf32>
    %36 = arith.addf %33, %35 : vector<16x128xf32>
    %37 = math.tanh %36 : vector<16x128xf32>
    %cst_20 = arith.constant 1.000000e+00 : f32
    %38 = vector.broadcast %cst_20 : f32 to vector<16x128xf32>
    %39 = arith.subf %38, %32 : vector<16x128xf32>
    %40 = arith.mulf %39, %37 : vector<16x128xf32>
    %41 = arith.extf %1 : vector<16x128xbf16> to vector<16x128xf32>
    %42 = arith.mulf %32, %41 : vector<16x128xf32>
    %43 = arith.addf %40, %42 : vector<16x128xf32>
    %44 = arith.truncf %43 : vector<16x128xf32> to vector<16x128xbf16>
    %c0_21 = arith.constant 0 : index
    %c0_22 = arith.constant 0 : index
    %45 = vector.load %arg9[%c0_21, %c0_22] : memref<128x128xbf16, #tpu.memory_space<vmem>>, vector<128x128xbf16>
    %cst_23 = arith.constant dense<0.000000e+00> : vector<16x128xf32>
    %46 = tpu.matmul %44, %45, %cst_23 {dimension_numbers = #tpu.dot_dimension_numbers<[1], [0], [0], [1], [0, 0, 1, 1], [], []>} : vector<16x128xbf16>, vector<128x128xbf16>, vector<16x128xf32> -> vector<16x128xf32>
    %c0_24 = arith.constant 0 : index
    %c0_25 = arith.constant 0 : index
    %47 = vector.load %arg10[%c0_24, %c0_25] : memref<1x128xf32, #tpu.memory_space<vmem>>, vector<1x128xf32>
    %48 = vector.broadcast %47 : vector<1x128xf32> to vector<16x128xf32>
    %49 = arith.addf %46, %48 : vector<16x128xf32>
    %c0_26 = arith.constant 0 : index
    %c0_27 = arith.constant 0 : index
    %50 = vector.load %arg11[%c0_26, %c0_27] : memref<16x128xf32, #tpu.memory_space<vmem>>, vector<16x128xf32>
    tpu.vector_store %arg11[%c0_26, %c0_27], %49 {strides = array<i32>} : memref<16x128xf32, #tpu.memory_space<vmem>>, vector<16x128xf32>,
    %51 = arith.truncf %43 : vector<16x128xf32> to vector<16x128xbf16>
    %c0_28 = arith.constant 0 : index
    %c0_29 = arith.constant 0 : index
    %52 = vector.load %arg12[%c0_28, %c0_29] : memref<16x128xbf16, #tpu.memory_space<vmem>>, vector<16x128xbf16>
    tpu.vector_store %arg12[%c0_28, %c0_29], %51 {strides = array<i32>} : memref<16x128xbf16, #tpu.memory_space<vmem>>, vector<16x128xbf16>,
    return
  }
  func.func @transform_0(%arg0: i32) -> (i32, i32) {
    %c0_i32 = arith.constant 0 : i32
    %c0_i32_0 = arith.constant 0 : i32
    return %arg0, %c0_i32 : i32, i32
  }
  func.func @transform_1(%arg0: i32) -> (i32, i32) {
    %c0_i32 = arith.constant 0 : i32
    %c0_i32_0 = arith.constant 0 : i32
    return %arg0, %c0_i32 : i32, i32
  }
  func.func @transform_2(%arg0: i32) -> (i32, i32) {
    %c0_i32 = arith.constant 0 : i32
    %c0_i32_0 = arith.constant 0 : i32
    %c0_i32_1 = arith.constant 0 : i32
    return %c0_i32, %c0_i32_0 : i32, i32
  }
  func.func @transform_3(%arg0: i32) -> (i32, i32) {
    %c0_i32 = arith.constant 0 : i32
    %c0_i32_0 = arith.constant 0 : i32
    %c0_i32_1 = arith.constant 0 : i32
    return %c0_i32, %c0_i32_0 : i32, i32
  }
  func.func @transform_4(%arg0: i32) -> (i32, i32) {
    %c0_i32 = arith.constant 0 : i32
    %c0_i32_0 = arith.constant 0 : i32
    %c0_i32_1 = arith.constant 0 : i32
    return %c0_i32, %c0_i32_0 : i32, i32
  }
  func.func @transform_5(%arg0: i32) -> (i32, i32) {
    %c0_i32 = arith.constant 0 : i32
    %c0_i32_0 = arith.constant 0 : i32
    %c0_i32_1 = arith.constant 0 : i32
    return %c0_i32, %c0_i32_0 : i32, i32
  }
  func.func @transform_6(%arg0: i32) -> (i32, i32) {
    %c0_i32 = arith.constant 0 : i32
    %c0_i32_0 = arith.constant 0 : i32
    %c0_i32_1 = arith.constant 0 : i32
    return %c0_i32, %c0_i32_0 : i32, i32
  }
  func.func @transform_7(%arg0: i32) -> (i32, i32) {
    %c0_i32 = arith.constant 0 : i32
    %c0_i32_0 = arith.constant 0 : i32
    %c0_i32_1 = arith.constant 0 : i32
    return %c0_i32, %c0_i32_0 : i32, i32
  }
  func.func @transform_8(%arg0: i32) -> (i32, i32) {
    %c0_i32 = arith.constant 0 : i32
    %c0_i32_0 = arith.constant 0 : i32
    %c0_i32_1 = arith.constant 0 : i32
    return %c0_i32, %c0_i32_0 : i32, i32
  }
  func.func @transform_9(%arg0: i32) -> (i32, i32) {
    %c0_i32 = arith.constant 0 : i32
    %c0_i32_0 = arith.constant 0 : i32
    %c0_i32_1 = arith.constant 0 : i32
    return %c0_i32, %c0_i32_0 : i32, i32
  }
  func.func @transform_10(%arg0: i32) -> (i32, i32) {
    %c0_i32 = arith.constant 0 : i32
    %c0_i32_0 = arith.constant 0 : i32
    return %arg0, %c0_i32 : i32, i32
  }
  func.func @transform_11(%arg0: i32) -> (i32, i32) {
    %c0_i32 = arith.constant 0 : i32
    %c0_i32_0 = arith.constant 0 : i32
    return %arg0, %c0_i32 : i32, i32
  }
}

</mosaic_0001>

<llo_original>
// kernel: rnn_forward.1
$region0: #{rnn_forward.1}
  #allocation0 [shape = 'u32[]', space=smem, size = 0x4, offset = 0x4, fixed_abs, tag = 'smem constant byte address 0x4 - core index']
  #allocation1 [shape = 'u32[144,128]{1,0:T(1,128)}', space=vmem, size = 0x12000, scoped, tag = 'internal scratch']
  %s0 = inlined_call_operand.vmem [shape: bf16[32,32], index: 0, kind: input, shape index: {}]
  %s1 = inlined_call_operand.vmem [shape: bf16[32,128], index: 1, kind: input, shape index: {}, may-alias: {1,11}]
  %s2 = inlined_call_operand.vmem [shape: bf16[32,128], index: 2, kind: input, shape index: {}]
  %s3 = inlined_call_operand.vmem [shape: f32[1,128], index: 3, kind: input, shape index: {}]
  %s4 = inlined_call_operand.hbm [shape: bf16[256,256], index: 4, kind: input, shape index: {}]
  %s5 = inlined_call_operand.vmem [shape: f32[1,256], index: 5, kind: input, shape index: {}]
  %s6 = inlined_call_operand.hbm [shape: bf16[256,256], index: 6, kind: input, shape index: {}]
  %s7 = inlined_call_operand.vmem [shape: f32[1,256], index: 7, kind: input, shape index: {}]
  %s8 = inlined_call_operand.vmem [shape: bf16[128,128], index: 8, kind: input, shape index: {}]
  %s9 = inlined_call_operand.vmem [shape: f32[1,128], index: 9, kind: input, shape index: {}]
  %s10 = inlined_call_operand.vmem [shape: f32[32,128], index: 10, kind: output, shape index: {0}]
  %s11 = inlined_call_operand.vmem [shape: bf16[32,128], index: 11, kind: output, shape index: {1}, may-alias: {1,11}]
  %12 = xla_tuple %s10, %s11
  %s13 = sld [smem:[#allocation0]]
  $region89: #{rnn_forward.1} parent=0
    _
  %s15 = ssub.s32 1, %s13
  %s16 = scalar_select 0, %s15, %s13
  $region1: #{rnn_forward.1} parent=0
    #allocation2 [shape = 'u8[131072]{0}', space=vmem, size = 0x20000, scoped, tag = 'input window, operand 4, single buffered']
    #allocation3 [shape = 's32[2]{0}', space=sflag, size = 0x8, scoped, tag = 'scoped memory for rnn_forward.1']
    #allocation4 [shape = 'u8[131072]{0}', space=vmem, size = 0x20000, scoped, tag = 'input window, operand 6, single buffered']
    #allocation5 [shape = 's32[1]{0}', space=sflag, size = 0x4, scoped, tag = 'scoped memory for rnn_forward.1']
    %17 = vsyncpa [#allocation3], 0
    %18 = vsyncpa [#allocation5], 0
    loop: start=0, step=1, limit=4
    $region2: #{rnn_forward.1} parent=1 // loop_pre_header
      _
    $region3: #{rnn_forward.1} parent=1 // loop_header
      %s20 = sphi 0, %s24
      %p21 = scmp.ge.s32.totalorder %s20, 4
      %s30 = sphi 0, %s32
      %s33 = sphi 0, %s30
      %s34 = sphi 0, %s33
      %s50 = sphi 0, %s34
      %s56 = sphi 0, %s58
      %s59 = sphi 0, %s56
      %s60 = sphi 0, %s59
      %s76 = sphi 0, %s60
      %s80 = sphi 0, %s80
      %s82 = sphi 0, %s80
      %s83 = sphi 0, %s82
      %s97 = sphi 0, %s83
      %s101 = sphi 0, %s101
      %s103 = sphi 0, %s101
      %s104 = sphi 0, %s103
      %s118 = sphi 0, %s104
      %s122 = sphi 0, %s122
      %s124 = sphi 0, %s122
      %s125 = sphi 0, %s124
      %s139 = sphi 0, %s125
      %s143 = sphi 0, %s143
      %s145 = sphi 0, %s143
      %s146 = sphi 0, %s145
      %s160 = sphi 0, %s146
      %s164 = sphi 0, %s164
      %s166 = sphi 0, %s164
      %s167 = sphi 0, %s166
      %s181 = sphi 0, %s167
      %s185 = sphi 0, %s185
      %s187 = sphi 0, %s185
      %s188 = sphi 0, %s187
      %s202 = sphi 0, %s188
      %s206 = sphi 0, %s206
      %s208 = sphi 0, %s206
      %s209 = sphi 0, %s208
      %s223 = sphi 0, %s209
      %s227 = sphi 0, %s227
      %s229 = sphi 0, %s227
      %s230 = sphi 0, %s229
      %s244 = sphi 0, %s230
      %s250 = sphi 0, %s252
      %s253 = sphi 0, %s250
      %s254 = sphi 0, %s253
      %s270 = sphi 0, %s254
      %s276 = sphi 0, %s278
      %s279 = sphi 0, %s276
      %s280 = sphi 0, %s279
      %s296 = sphi 0, %s280
    $region4: #{rnn_forward.1} parent=1 // loop_header_branch
      %23 = sbr.rel (%p21) target = $region8
    $region5: #{rnn_forward.1} parent=1 // loop_body
      %s25 = ssub.s32 %s20, 1
      %s26 = ssub.s32 %s20, 2
      %s27 = sadd.s32 %s20, 1
      %s28 = ssub.s32 %s20, %s27
      %p29 = scmp.eq.s32.totalorder %s28, 0
      %s31 = sadd.s32 %s30, 1
      %s32 = scalar_select %p29, %s30, %s31
      %p35 = pneg %p29
      %p36 = scmp.eq.s32.totalorder %s20, 1
      %p37 = por %p35, %p36
      %p38 = scmp.ne.s32.totalorder %s30, %s33
      %p39 = scmp.eq.s32.totalorder %s20, 0
      %p40 = por %p38, %p39
      %p41 = scmp.ne.s32.totalorder %s30, %s33
      %p42 = scmp.eq.s32.totalorder %s25, 1
      %p43 = por %p41, %p42
      %p44 = scmp.ne.s32.totalorder %s33, %s34
      %p45 = scmp.eq.s32.totalorder %s25, 0
      %p46 = por %p44, %p45
      %p47 = scmp.ne.s32.totalorder %s33, %s34
      %p48 = scmp.eq.s32.totalorder %s26, 1
      %p49 = por %p47, %p48
      %p51 = scmp.ne.s32.totalorder %s34, %s50
      %p52 = scmp.eq.s32.totalorder %s26, 0
      %p53 = por %p51, %p52
      %s54 = ssub.s32 %s20, %s27
      %p55 = scmp.eq.s32.totalorder %s54, 0
      %s57 = sadd.s32 %s56, 1
      %s58 = scalar_select %p55, %s56, %s57
      %p61 = pneg %p55
      %p62 = scmp.eq.s32.totalorder %s20, 1
      %p63 = por %p61, %p62
      %p64 = scmp.ne.s32.totalorder %s56, %s59
      %p65 = scmp.eq.s32.totalorder %s20, 0
      %p66 = por %p64, %p65
      %p67 = scmp.ne.s32.totalorder %s56, %s59
      %p68 = scmp.eq.s32.totalorder %s25, 1
      %p69 = por %p67, %p68
      %p70 = scmp.ne.s32.totalorder %s59, %s60
      %p71 = scmp.eq.s32.totalorder %s25, 0
      %p72 = por %p70, %p71
      %p73 = scmp.ne.s32.totalorder %s59, %s60
      %p74 = scmp.eq.s32.totalorder %s26, 1
      %p75 = por %p73, %p74
      %p77 = scmp.ne.s32.totalorder %s60, %s76
      %p78 = scmp.eq.s32.totalorder %s26, 0
      %p79 = por %p77, %p78
      %s81 = sadd.s32 %s80, 1
      %p84 = scmp.eq.s32.totalorder %s20, 1
      %p85 = scmp.ne.s32.totalorder %s80, %s82
      %p86 = scmp.eq.s32.totalorder %s20, 0
      %p87 = por %p85, %p86
      %p88 = scmp.ne.s32.totalorder %s80, %s82
      %p89 = scmp.eq.s32.totalorder %s25, 1
      %p90 = por %p88, %p89
      %p91 = scmp.ne.s32.totalorder %s82, %s83
      %p92 = scmp.eq.s32.totalorder %s25, 0
      %p93 = por %p91, %p92
      %p94 = scmp.ne.s32.totalorder %s82, %s83
      %p95 = scmp.eq.s32.totalorder %s26, 1
      %p96 = por %p94, %p95
      %p98 = scmp.ne.s32.totalorder %s83, %s97
      %p99 = scmp.eq.s32.totalorder %s26, 0
      %p100 = por %p98, %p99
      %s102 = sadd.s32 %s101, 1
      %p105 = scmp.eq.s32.totalorder %s20, 1
      %p106 = scmp.ne.s32.totalorder %s101, %s103
      %p107 = scmp.eq.s32.totalorder %s20, 0
      %p108 = por %p106, %p107
      %p109 = scmp.ne.s32.totalorder %s101, %s103
      %p110 = scmp.eq.s32.totalorder %s25, 1
      %p111 = por %p109, %p110
      %p112 = scmp.ne.s32.totalorder %s103, %s104
      %p113 = scmp.eq.s32.totalorder %s25, 0
      %p114 = por %p112, %p113
      %p115 = scmp.ne.s32.totalorder %s103, %s104
      %p116 = scmp.eq.s32.totalorder %s26, 1
      %p117 = por %p115, %p116
      %p119 = scmp.ne.s32.totalorder %s104, %s118
      %p120 = scmp.eq.s32.totalorder %s26, 0
      %p121 = por %p119, %p120
      %s123 = sadd.s32 %s122, 1
      %p126 = scmp.eq.s32.totalorder %s20, 1
      %p127 = scmp.ne.s32.totalorder %s122, %s124
      %p128 = scmp.eq.s32.totalorder %s20, 0
      %p129 = por %p127, %p128
      %p130 = scmp.ne.s32.totalorder %s122, %s124
      %p131 = scmp.eq.s32.totalorder %s25, 1
      %p132 = por %p130, %p131
      %p133 = scmp.ne.s32.totalorder %s124, %s125
      %p134 = scmp.eq.s32.totalorder %s25, 0
      %p135 = por %p133, %p134
      %p136 = scmp.ne.s32.totalorder %s124, %s125
      %p137 = scmp.eq.s32.totalorder %s26, 1
      %p138 = por %p136, %p137
      %p140 = scmp.ne.s32.totalorder %s125, %s139
      %p141 = scmp.eq.s32.totalorder %s26, 0
      %p142 = por %p140, %p141
      %s144 = sadd.s32 %s143, 1
      %p147 = scmp.eq.s32.totalorder %s20, 1
      %p148 = scmp.ne.s32.totalorder %s143, %s145
      %p149 = scmp.eq.s32.totalorder %s20, 0
      %p150 = por %p148, %p149
      %p151 = scmp.ne.s32.totalorder %s143, %s145
      %p152 = scmp.eq.s32.totalorder %s25, 1
      %p153 = por %p151, %p152
      %p154 = scmp.ne.s32.totalorder %s145, %s146
      %p155 = scmp.eq.s32.totalorder %s25, 0
      %p156 = por %p154, %p155
      %p157 = scmp.ne.s32.totalorder %s145, %s146
      %p158 = scmp.eq.s32.totalorder %s26, 1
      %p159 = por %p157, %p158
      %p161 = scmp.ne.s32.totalorder %s146, %s160
      %p162 = scmp.eq.s32.totalorder %s26, 0
      %p163 = por %p161, %p162
      %s165 = sadd.s32 %s164, 1
      %p168 = scmp.eq.s32.totalorder %s20, 1
      %p169 = scmp.ne.s32.totalorder %s164, %s166
      %p170 = scmp.eq.s32.totalorder %s20, 0
      %p171 = por %p169, %p170
      %p172 = scmp.ne.s32.totalorder %s164, %s166
      %p173 = scmp.eq.s32.totalorder %s25, 1
      %p174 = por %p172, %p173
      %p175 = scmp.ne.s32.totalorder %s166, %s167
      %p176 = scmp.eq.s32.totalorder %s25, 0
      %p177 = por %p175, %p176
      %p178 = scmp.ne.s32.totalorder %s166, %s167
      %p179 = scmp.eq.s32.totalorder %s26, 1
      %p180 = por %p178, %p179
      %p182 = scmp.ne.s32.totalorder %s167, %s181
      %p183 = scmp.eq.s32.totalorder %s26, 0
      %p184 = por %p182, %p183
      %s186 = sadd.s32 %s185, 1
      %p189 = scmp.eq.s32.totalorder %s20, 1
      %p190 = scmp.ne.s32.totalorder %s185, %s187
      %p191 = scmp.eq.s32.totalorder %s20, 0
      %p192 = por %p190, %p191
      %p193 = scmp.ne.s32.totalorder %s185, %s187
      %p194 = scmp.eq.s32.totalorder %s25, 1
      %p195 = por %p193, %p194
      %p196 = scmp.ne.s32.totalorder %s187, %s188
      %p197 = scmp.eq.s32.totalorder %s25, 0
      %p198 = por %p196, %p197
      %p199 = scmp.ne.s32.totalorder %s187, %s188
      %p200 = scmp.eq.s32.totalorder %s26, 1
      %p201 = por %p199, %p200
      %p203 = scmp.ne.s32.totalorder %s188, %s202
      %p204 = scmp.eq.s32.totalorder %s26, 0
      %p205 = por %p203, %p204
      %s207 = sadd.s32 %s206, 1
      %p210 = scmp.eq.s32.totalorder %s20, 1
      %p211 = scmp.ne.s32.totalorder %s206, %s208
      %p212 = scmp.eq.s32.totalorder %s20, 0
      %p213 = por %p211, %p212
      %p214 = scmp.ne.s32.totalorder %s206, %s208
      %p215 = scmp.eq.s32.totalorder %s25, 1
      %p216 = por %p214, %p215
      %p217 = scmp.ne.s32.totalorder %s208, %s209
      %p218 = scmp.eq.s32.totalorder %s25, 0
      %p219 = por %p217, %p218
      %p220 = scmp.ne.s32.totalorder %s208, %s209
      %p221 = scmp.eq.s32.totalorder %s26, 1
      %p222 = por %p220, %p221
      %p224 = scmp.ne.s32.totalorder %s209, %s223
      %p225 = scmp.eq.s32.totalorder %s26, 0
      %p226 = por %p224, %p225
      %s228 = sadd.s32 %s227, 1
      %p231 = scmp.eq.s32.totalorder %s20, 1
      %p232 = scmp.ne.s32.totalorder %s227, %s229
      %p233 = scmp.eq.s32.totalorder %s20, 0
      %p234 = por %p232, %p233
      %p235 = scmp.ne.s32.totalorder %s227, %s229
      %p236 = scmp.eq.s32.totalorder %s25, 1
      %p237 = por %p235, %p236
      %p238 = scmp.ne.s32.totalorder %s229, %s230
      %p239 = scmp.eq.s32.totalorder %s25, 0
      %p240 = por %p238, %p239
      %p241 = scmp.ne.s32.totalorder %s229, %s230
      %p242 = scmp.eq.s32.totalorder %s26, 1
      %p243 = por %p241, %p242
      %p245 = scmp.ne.s32.totalorder %s230, %s244
      %p246 = scmp.eq.s32.totalorder %s26, 0
      %p247 = por %p245, %p246
      %s248 = ssub.s32 %s20, %s27
      %p249 = scmp.eq.s32.totalorder %s248, 0
      %s251 = sadd.s32 %s250, 1
      %s252 = scalar_select %p249, %s250, %s251
      %p255 = pneg %p249
      %p256 = scmp.eq.s32.totalorder %s20, 1
      %p257 = por %p255, %p256
      %p258 = scmp.ne.s32.totalorder %s250, %s253
      %p259 = scmp.eq.s32.totalorder %s20, 0
      %p260 = por %p258, %p259
      %p261 = scmp.ne.s32.totalorder %s250, %s253
      %p262 = scmp.eq.s32.totalorder %s25, 1
      %p263 = por %p261, %p262
      %p264 = scmp.ne.s32.totalorder %s253, %s254
      %p265 = scmp.eq.s32.totalorder %s25, 0
      %p266 = por %p264, %p265
      %p267 = scmp.ne.s32.totalorder %s253, %s254
      %p268 = scmp.eq.s32.totalorder %s26, 1
      %p269 = por %p267, %p268
      %p271 = scmp.ne.s32.totalorder %s254, %s270
      %p272 = scmp.eq.s32.totalorder %s26, 0
      %p273 = por %p271, %p272
      %s274 = ssub.s32 %s20, %s27
      %p275 = scmp.eq.s32.totalorder %s274, 0
      %s277 = sadd.s32 %s276, 1
      %s278 = scalar_select %p275, %s276, %s277
      %p281 = pneg %p275
      %p282 = scmp.eq.s32.totalorder %s20, 1
      %p283 = por %p281, %p282
      %p284 = scmp.ne.s32.totalorder %s276, %s279
      %p285 = scmp.eq.s32.totalorder %s20, 0
      %p286 = por %p284, %p285
      %p287 = scmp.ne.s32.totalorder %s276, %s279
      %p288 = scmp.eq.s32.totalorder %s25, 1
      %p289 = por %p287, %p288
      %p290 = scmp.ne.s32.totalorder %s279, %s280
      %p291 = scmp.eq.s32.totalorder %s25, 0
      %p292 = por %p290, %p291
      %p293 = scmp.ne.s32.totalorder %s279, %s280
      %p294 = scmp.eq.s32.totalorder %s26, 1
      %p295 = por %p293, %p294
      %p297 = scmp.ne.s32.totalorder %s280, %s296
      %p298 = scmp.eq.s32.totalorder %s26, 0
      %p299 = por %p297, %p298
      %p300 = scmp.le.s32.totalorder 1, %s20
      %p301 = scmp.lt.s32.totalorder %s20, 3
      %p302 = pnand %p300, %p301
      %p303 = pneg %p302
      // Predicated region
      $region9: #{rnn_forward.1} parent=5 // pred_check
        _
      $region10: #{rnn_forward.1} parent=5 // pred_check_branch
        %305 = sbr.rel (%p302) target = $region12
      $region11: #{rnn_forward.1} parent=5 // pred_region
        %s306 = ssub.s32 %s20, 1
        // Predicated region
        $region13: #{rnn_forward.1} parent=11 // pred_check
          %p307 = pneg %p93
        $region14: #{rnn_forward.1} parent=11 // pred_check_branch
          %309 = sbr.rel (%p307) target = $region16
        $region15: #{rnn_forward.1} parent=11 // pred_region
          _
        $region16: #{rnn_forward.1} parent=11 // pred_fallthru
          _
        // Predicated region
        $region17: #{rnn_forward.1} parent=11 // pred_check
          %p310 = pneg %p114
        $region18: #{rnn_forward.1} parent=11 // pred_check_branch
          %312 = sbr.rel (%p310) target = $region20
        $region19: #{rnn_forward.1} parent=11 // pred_region
          _
        $region20: #{rnn_forward.1} parent=11 // pred_fallthru
          _
        // Predicated region
        $region21: #{rnn_forward.1} parent=11 // pred_check
          %p313 = pneg %p135
        $region22: #{rnn_forward.1} parent=11 // pred_check_branch
          %315 = sbr.rel (%p313) target = $region24
        $region23: #{rnn_forward.1} parent=11 // pred_region
          %s317 = ssub.s32 4096, 4096
          %318 = vsyncadd [#allocation3], %s317
          %s319 = sshll.u32 [#allocation2], 4
          %s320 = int_to_ptr.vmem [resolvable:$true] %s319
          %325 = dma.hbm_to_vmem [thread:$0]  %s4, 4096, %s320, [#allocation3], 128, 128, 8
        $region24: #{rnn_forward.1} parent=11 // pred_fallthru
          _
        // Predicated region
        $region25: #{rnn_forward.1} parent=11 // pred_check
          %p326 = pneg %p156
        $region26: #{rnn_forward.1} parent=11 // pred_check_branch
          %328 = sbr.rel (%p326) target = $region28
        $region27: #{rnn_forward.1} parent=11 // pred_region
          _
        $region28: #{rnn_forward.1} parent=11 // pred_fallthru
          _
        // Predicated region
        $region29: #{rnn_forward.1} parent=11 // pred_check
          %p329 = pneg %p177
        $region30: #{rnn_forward.1} parent=11 // pred_check_branch
          %331 = sbr.rel (%p329) target = $region32
        $region31: #{rnn_forward.1} parent=11 // pred_region
          %s333 = ssub.s32 4096, 4096
          %334 = vsyncadd [#allocation5], %s333
          %s335 = sshll.u32 [#allocation4], 4
          %s336 = int_to_ptr.vmem [resolvable:$true] %s335
          %341 = dma.hbm_to_vmem [thread:$0]  %s6, 4096, %s336, [#allocation5], 128, 128, 8
        $region32: #{rnn_forward.1} parent=11 // pred_fallthru
          _
        // Predicated region
        $region33: #{rnn_forward.1} parent=11 // pred_check
          %p342 = pneg %p198
        $region34: #{rnn_forward.1} parent=11 // pred_check_branch
          %344 = sbr.rel (%p342) target = $region36
        $region35: #{rnn_forward.1} parent=11 // pred_region
          _
        $region36: #{rnn_forward.1} parent=11 // pred_fallthru
          _
        // Predicated region
        $region37: #{rnn_forward.1} parent=11 // pred_check
          %p345 = pneg %p219
        $region38: #{rnn_forward.1} parent=11 // pred_check_branch
          %347 = sbr.rel (%p345) target = $region40
        $region39: #{rnn_forward.1} parent=11 // pred_region
          _
        $region40: #{rnn_forward.1} parent=11 // pred_fallthru
          _
        // Predicated region
        $region41: #{rnn_forward.1} parent=11 // pred_check
          %p348 = pneg %p240
        $region42: #{rnn_forward.1} parent=11 // pred_check_branch
          %350 = sbr.rel (%p348) target = $region44
        $region43: #{rnn_forward.1} parent=11 // pred_region
          _
        $region44: #{rnn_forward.1} parent=11 // pred_fallthru
          _
      $region12: #{rnn_forward.1} parent=5 // pred_fallthru
        _
      %p351 = scmp.lt.s32.totalorder %s20, 2
      // Predicated region
      $region45: #{rnn_forward.1} parent=5 // pred_check
        %p352 = pneg %p351
      $region46: #{rnn_forward.1} parent=5 // pred_check_branch
        %354 = sbr.rel (%p352) target = $region48
      $region47: #{rnn_forward.1} parent=5 // pred_region
        // Predicated region
        $region49: #{rnn_forward.1} parent=47 // pred_check
          %p355 = pneg %p40
        $region50: #{rnn_forward.1} parent=47 // pred_check_branch
          %357 = sbr.rel (%p355) target = $region52
        $region51: #{rnn_forward.1} parent=47 // pred_region
          %s358 = smul.u32 2, %s20
          %p359 = scmp.lt.s32.totalorder %s358, 3
          %s360 = scalar_select %p359, %s358, 3
          %s361 = smul.addr %s360, 4
          %s362 = scalar_lea.vmem %s0, %s361
          %s363 = smul.u32 2, %s20
        $region52: #{rnn_forward.1} parent=47 // pred_fallthru
          _
        // Predicated region
        $region53: #{rnn_forward.1} parent=47 // pred_check
          %p364 = pneg %p66
        $region54: #{rnn_forward.1} parent=47 // pred_check_branch
          %366 = sbr.rel (%p364) target = $region56
        $region55: #{rnn_forward.1} parent=47 // pred_region
          %s367 = smul.u32 2, %s20
          %p368 = scmp.lt.s32.totalorder %s367, 3
          %s369 = scalar_select %p368, %s367, 3
          %s370 = smul.addr %s369, 4
          %s371 = scalar_lea.vmem %s1, %s370
          %s372 = smul.u32 2, %s20
        $region56: #{rnn_forward.1} parent=47 // pred_fallthru
          _
      $region48: #{rnn_forward.1} parent=5 // pred_fallthru
        _
      %p373 = scmp.le.s32.totalorder 1, %s20
      %p374 = scmp.lt.s32.totalorder %s20, 3
      %p375 = pnand %p373, %p374
      %p376 = pneg %p375
      // Predicated region
      $region57: #{rnn_forward.1} parent=5 // pred_check
        _
      $region58: #{rnn_forward.1} parent=5 // pred_check_branch
        %378 = sbr.rel (%p375) target = $region60
      $region59: #{rnn_forward.1} parent=5 // pred_region
        %s379 = ssub.s32 %s20, 1
        // Predicated region
        $region61: #{rnn_forward.1} parent=59 // pred_check
          %p380 = pneg %p135
        $region62: #{rnn_forward.1} parent=59 // pred_check_branch
          %382 = sbr.rel (%p380) target = $region64
        $region63: #{rnn_forward.1} parent=59 // pred_region
          %383 = dma.done [#allocation3], 4096
        $region64: #{rnn_forward.1} parent=59 // pred_fallthru
          _
        // Predicated region
        $region65: #{rnn_forward.1} parent=59 // pred_check
          %p384 = pneg %p177
        $region66: #{rnn_forward.1} parent=59 // pred_check_branch
          %386 = sbr.rel (%p384) target = $region68
        $region67: #{rnn_forward.1} parent=59 // pred_region
          %387 = dma.done [#allocation5], 4096
        $region68: #{rnn_forward.1} parent=59 // pred_fallthru
          _
        %s388 = smul.u32 2, %s25
        %p389 = scmp.lt.s32.totalorder %s388, 3
        %s390 = scalar_select %p389, %s388, 3
        %s391 = smul.addr %s390, 4
        %s392 = scalar_lea.vmem %s0, %s391
        %p393 = pneg %p46
        %p394 = pneg %p43
        %s395 = smul.u32 2, %s25
        %p396 = scmp.lt.s32.totalorder %s395, 3
        %s397 = scalar_select %p396, %s395, 3
        %s398 = smul.addr %s397, 4
        %s399 = scalar_lea.vmem %s1, %s398
        %p400 = pneg %p72
        %p401 = pneg %p69
        %p402 = pneg %p93
        %p403 = pneg %p90
        %p404 = pneg %p114
        %p405 = pneg %p111
        %p406 = pneg %p135
        %p407 = pneg %p132
        %p408 = pneg %p156
        %p409 = pneg %p153
        %p410 = pneg %p177
        %p411 = pneg %p174
        %p412 = pneg %p198
        %p413 = pneg %p195
        %p414 = pneg %p219
        %p415 = pneg %p216
        %p416 = pneg %p240
        %p417 = pneg %p237
        %p418 = pneg %p266
        %p419 = pneg %p263
        %s420 = smul.u32 2, %s25
        %p421 = scmp.lt.s32.totalorder %s420, 3
        %s422 = scalar_select %p421, %s420, 3
        %s423 = smul.addr %s422, 8
        %s424 = scalar_lea.vmem %s10, %s423
        %p425 = pneg %p292
        %p426 = pneg %p289
        %s427 = smul.u32 2, %s25
        %p428 = scmp.lt.s32.totalorder %s427, 3
        %s429 = scalar_select %p428, %s427, 3
        %s430 = smul.addr %s429, 4
        %s431 = scalar_lea.vmem %s11, %s430
        %s432 = smul.u32 2, %s25
        %p433 = scmp.lt.s32.totalorder %s432, 3
        %s434 = scalar_select %p433, %s432, 3
        %s435 = smul.addr %s434, 4
        %s436 = scalar_lea.vmem %s0, %s435
        %s437 = smul.u32 2, %s25
        %s438 = smul.u32 2, %s25
        %p439 = scmp.lt.s32.totalorder %s438, 3
        %s440 = scalar_select %p439, %s438, 3
        %s441 = smul.addr %s440, 4
        %s442 = scalar_lea.vmem %s1, %s441
        %s443 = smul.u32 2, %s25
        %s444 = smul.u32 2, %s25
        %p445 = scmp.lt.s32.totalorder %s444, 3
        %s446 = scalar_select %p445, %s444, 3
        %s447 = smul.addr %s446, 8
        %s448 = scalar_lea.vmem %s10, %s447
        %s449 = smul.u32 2, %s25
        %s450 = smul.u32 2, %s25
        %p451 = scmp.lt.s32.totalorder %s450, 3
        %s452 = scalar_select %p451, %s450, 3
        %s453 = smul.addr %s452, 4
        %s454 = scalar_lea.vmem %s11, %s453
        %s455 = smul.u32 2, %s25
        %v457 = vld [vmem:[%s436] sm:$0xf]
        %v458 = vld [vmem:[%s436 + $0x4] sm:$0xf]
        %v459 = vld [vmem:[%s442] sm:$0xf]
        %v460 = vld [vmem:[%s442 + $0x4] sm:$0xf]
        %v461 = vld [vmem:[%s2] sm:$0xf]
        %v462 = vld [vmem:[%s2 + $0x4] sm:$0xf]
        %v463 = vld [vmem:[%s2 + $0x8] sm:$0xf]
        %v464 = vld [vmem:[%s2 + $0xc] sm:$0xf]
        %v465 = vld [vmem:[%s3] sm:$0x1]
        %v467 = vlaneseq
        %v468 = vshrl.u32 %v467, 7
        %v469 = vsub.s32 0, %v468
        %v470 = vrot.slane %v465, %v469
        %v474 = vunpack.c.l.b16 %v457
        %v475 = vunpack.c.l.b16 %v458
        %v476 = vpack.c.b16 %v475, %v474
        %v481 = vunpack.c.l.b16 %v461
        %v482 = vunpack.c.l.b16 %v462
        %v483 = vunpack.c.l.b16 %v463
        %v484 = vunpack.c.l.b16 %v464
        %v485 = vpack.c.b16 %v482, %v481
        %v486 = vpack.c.b16 %v484, %v483
        %vm489 = vcmask 261120
        %v491 = vsel %vm489, %v476, 0
        %493 = vmatprep.subr.bf16.mxu0 0
        %494 = vmatpush1.bf16.msra.mxu0 0
        %495 = vmatprep.subr.bf16.mxu0 0
        %496 = vmatpush1.bf16.msra.mxu0 0
        %497 = vmatprep.subr.bf16.mxu0 0
        %498 = vmatpush1.bf16.msra.mxu0 0
        %499 = vmatprep.subr.bf16.mxu0 0
        %500 = vmatpush1.bf16.msra.mxu0 0
        %501 = vmatprep.subr.bf16.mxu0 0
        %502 = vmatpush1.bf16.msra.mxu0 0
        %503 = vmatprep.subr.bf16.mxu0 0
        %504 = vmatpush1.bf16.msra.mxu0 0
        %505 = vmatprep.subr.bf16.mxu0 0
        %506 = vmatpush1.bf16.msra.mxu0 %v486
        %507 = vmatprep.subr.bf16.mxu0 0
        %508 = vmatpush1.bf16.msra.mxu0 %v485
        %509 = vmatprep.subr.bf16.mxu0 0
        %510 = vmatpush2.bf16.msra.mxu0 0
        %511 = vmatprep.subr.bf16.mxu0 0
        %512 = vmatpush2.bf16.msra.mxu0 0
        %513 = vmatprep.subr.bf16.mxu0 0
        %514 = vmatpush2.bf16.msra.mxu0 0
        %515 = vmatprep.subr.bf16.mxu0 0
        %516 = vmatpush2.bf16.msra.mxu0 0
        %517 = vmatprep.subr.bf16.mxu0 0
        %518 = vmatpush2.bf16.msra.mxu0 0
        %519 = vmatprep.subr.bf16.mxu0 0
        %520 = vmatpush2.bf16.msra.mxu0 0
        %521 = vmatprep.subr.bf16.mxu0 0
        %522 = vmatpush2.bf16.msra.mxu0 0
        %523 = vmatprep.subr.bf16.mxu0 0
        %524 = vmatpush2.bf16.msra.mxu0 0
        %525 = vmatprep.mubr.bf16.mxu0 0
        %526 = vmatmul.mubr.bf16.gmra.mxu0 %v491
        %v527 = vpop.f32.mrf.mxu0
        %v528 = vadd.f32 %v470, %v527
        %v529 = vpop.f32.mrf.mxu0
        %v530 = vpop.f32.mrf.mxu0
        %v531 = vadd.f32 %v470, %v530
        %v532 = vpop.f32.mrf.mxu0
        %533 = vdwg.mxu0
        %v534 = vmax.f32 %v528, 0.0
        %v535 = vmax.f32 %v531, 0.0
        %v536 = vpack.c.bf16 %v535, %v534
        %v539 = vunpack.c.l.b16 %v459
        %v540 = vunpack.c.l.b16 %v460
        %v541 = vpack.c.b16 %v540, %v539
        %v543 = vld [vmem:[#allocation2] sm:$0xff]
        %v544 = vld [vmem:[#allocation2 + $0x8] sm:$0xff]
        %v545 = vld [vmem:[#allocation2 + $0x10] sm:$0xff]
        %v546 = vld [vmem:[#allocation2 + $0x18] sm:$0xff]
        %v547 = vld [vmem:[#allocation2 + $0x20] sm:$0xff]
        %v548 = vld [vmem:[#allocation2 + $0x28] sm:$0xff]
        %v549 = vld [vmem:[#allocation2 + $0x30] sm:$0xff]
        %v550 = vld [vmem:[#allocation2 + $0x38] sm:$0xff]
        %v551 = vld [vmem:[#allocation2 + $0x40] sm:$0xff]
        %v552 = vld [vmem:[#allocation2 + $0x48] sm:$0xff]
        %v553 = vld [vmem:[#allocation2 + $0x50] sm:$0xff]
        %v554 = vld [vmem:[#allocation2 + $0x58] sm:$0xff]
        %v555 = vld [vmem:[#allocation2 + $0x60] sm:$0xff]
        %v556 = vld [vmem:[#allocation2 + $0x68] sm:$0xff]
        %v557 = vld [vmem:[#allocation2 + $0x70] sm:$0xff]
        %v558 = vld [vmem:[#allocation2 + $0x78] sm:$0xff]
        %v559 = vld [vmem:[#allocation2 + $0x80] sm:$0xff]
        %v560 = vld [vmem:[#allocation2 + $0x88] sm:$0xff]
        %v561 = vld [vmem:[#allocation2 + $0x90] sm:$0xff]
        %v562 = vld [vmem:[#allocation2 + $0x98] sm:$0xff]
        %v563 = vld [vmem:[#allocation2 + $0xa0] sm:$0xff]
        %v564 = vld [vmem:[#allocation2 + $0xa8] sm:$0xff]
        %v565 = vld [vmem:[#allocation2 + $0xb0] sm:$0xff]
        %v566 = vld [vmem:[#allocation2 + $0xb8] sm:$0xff]
        %v567 = vld [vmem:[#allocation2 + $0xc0] sm:$0xff]
        %v568 = vld [vmem:[#allocation2 + $0xc8] sm:$0xff]
        %v569 = vld [vmem:[#allocation2 + $0xd0] sm:$0xff]
        %v570 = vld [vmem:[#allocation2 + $0xd8] sm:$0xff]
        %v571 = vld [vmem:[#allocation2 + $0xe0] sm:$0xff]
        %v572 = vld [vmem:[#allocation2 + $0xe8] sm:$0xff]
        %v573 = vld [vmem:[#allocation2 + $0xf0] sm:$0xff]
        %v574 = vld [vmem:[#allocation2 + $0xf8] sm:$0xff]
        %v575 = vld [vmem:[%s5] sm:$0x3]
        %v577 = vlaneseq
        %v578 = vshrl.u32 %v577, 7
        %v579 = vsub.s32 0, %v578
        %v580 = vrot.slane %v575, %v579
        %v581 = vlaneseq
        %v582 = vshrl.u32 %v581, 7
        %v583 = vsub.s32 1, %v582
        %v584 = vrot.slane %v575, %v583
        %v619 = vunpack.c.l.b16 %v543
        %v620 = vunpack.c.h.b16 %v543
        %v621 = vunpack.c.l.b16 %v544
        %v622 = vunpack.c.h.b16 %v544
        %v623 = vunpack.c.l.b16 %v545
        %v624 = vunpack.c.h.b16 %v545
        %v625 = vunpack.c.l.b16 %v546
        %v626 = vunpack.c.h.b16 %v546
        %v627 = vunpack.c.l.b16 %v547
        %v628 = vunpack.c.h.b16 %v547
        %v629 = vunpack.c.l.b16 %v548
        %v630 = vunpack.c.h.b16 %v548
        %v631 = vunpack.c.l.b16 %v549
        %v632 = vunpack.c.h.b16 %v549
        %v633 = vunpack.c.l.b16 %v550
        %v634 = vunpack.c.h.b16 %v550
        %v635 = vunpack.c.l.b16 %v551
        %v636 = vunpack.c.h.b16 %v551
        %v637 = vunpack.c.l.b16 %v552
        %v638 = vunpack.c.h.b16 %v552
        %v639 = vunpack.c.l.b16 %v553
        %v640 = vunpack.c.h.b16 %v553
        %v641 = vunpack.c.l.b16 %v554
        %v642 = vunpack.c.h.b16 %v554
        %v643 = vunpack.c.l.b16 %v555
        %v644 = vunpack.c.h.b16 %v555
        %v645 = vunpack.c.l.b16 %v556
        %v646 = vunpack.c.h.b16 %v556
        %v647 = vunpack.c.l.b16 %v557
        %v648 = vunpack.c.h.b16 %v557
        %v649 = vunpack.c.l.b16 %v558
        %v650 = vunpack.c.h.b16 %v558
        %v651 = vunpack.c.l.b16 %v559
        %v652 = vunpack.c.h.b16 %v559
        %v653 = vunpack.c.l.b16 %v560
        %v654 = vunpack.c.h.b16 %v560
        %v655 = vunpack.c.l.b16 %v561
        %v656 = vunpack.c.h.b16 %v561
        %v657 = vunpack.c.l.b16 %v562
        %v658 = vunpack.c.h.b16 %v562
        %v659 = vunpack.c.l.b16 %v563
        %v660 = vunpack.c.h.b16 %v563
        %v661 = vunpack.c.l.b16 %v564
        %v662 = vunpack.c.h.b16 %v564
        %v663 = vunpack.c.l.b16 %v565
        %v664 = vunpack.c.h.b16 %v565
        %v665 = vunpack.c.l.b16 %v566
        %v666 = vunpack.c.h.b16 %v566
        %v667 = vunpack.c.l.b16 %v567
        %v668 = vunpack.c.h.b16 %v567
        %v669 = vunpack.c.l.b16 %v568
        %v670 = vunpack.c.h.b16 %v568
        %v671 = vunpack.c.l.b16 %v569
        %v672 = vunpack.c.h.b16 %v569
        %v673 = vunpack.c.l.b16 %v570
        %v674 = vunpack.c.h.b16 %v570
        %v675 = vunpack.c.l.b16 %v571
        %v676 = vunpack.c.h.b16 %v571
        %v677 = vunpack.c.l.b16 %v572
        %v678 = vunpack.c.h.b16 %v572
        %v679 = vunpack.c.l.b16 %v573
        %v680 = vunpack.c.h.b16 %v573
        %v681 = vunpack.c.l.b16 %v574
        %v682 = vunpack.c.h.b16 %v574
        %v683 = vpack.c.b16 %v621, %v619
        %v684 = vpack.c.b16 %v622, %v620
        %v685 = vpack.c.b16 %v625, %v623
        %v686 = vpack.c.b16 %v626, %v624
        %v687 = vpack.c.b16 %v629, %v627
        %v688 = vpack.c.b16 %v630, %v628
        %v689 = vpack.c.b16 %v633, %v631
        %v690 = vpack.c.b16 %v634, %v632
        %v691 = vpack.c.b16 %v637, %v635
        %v692 = vpack.c.b16 %v638, %v636
        %v693 = vpack.c.b16 %v641, %v639
        %v694 = vpack.c.b16 %v642, %v640
        %v695 = vpack.c.b16 %v645, %v643
        %v696 = vpack.c.b16 %v646, %v644
        %v697 = vpack.c.b16 %v649, %v647
        %v698 = vpack.c.b16 %v650, %v648
        %v699 = vpack.c.b16 %v653, %v651
        %v700 = vpack.c.b16 %v654, %v652
        %v701 = vpack.c.b16 %v657, %v655
        %v702 = vpack.c.b16 %v658, %v656
        %v703 = vpack.c.b16 %v661, %v659
        %v704 = vpack.c.b16 %v662, %v660
        %v705 = vpack.c.b16 %v665, %v663
        %v706 = vpack.c.b16 %v666, %v664
        %v707 = vpack.c.b16 %v669, %v667
        %v708 = vpack.c.b16 %v670, %v668
        %v709 = vpack.c.b16 %v673, %v671
        %v710 = vpack.c.b16 %v674, %v672
        %v711 = vpack.c.b16 %v677, %v675
        %v712 = vpack.c.b16 %v678, %v676
        %v713 = vpack.c.b16 %v681, %v679
        %v714 = vpack.c.b16 %v682, %v680
        %747 = vmatprep.subr.bf16.mxu0 %v698
        %748 = vmatpush1.bf16.msra.mxu0 %v697
        %749 = vmatprep.subr.bf16.mxu0 %v696
        %750 = vmatpush1.bf16.msra.mxu0 %v695
        %751 = vmatprep.subr.bf16.mxu0 %v694
        %752 = vmatpush1.bf16.msra.mxu0 %v693
        %753 = vmatprep.subr.bf16.mxu0 %v692
        %754 = vmatpush1.bf16.msra.mxu0 %v691
        %755 = vmatprep.subr.bf16.mxu0 %v690
        %756 = vmatpush1.bf16.msra.mxu0 %v689
        %757 = vmatprep.subr.bf16.mxu0 %v688
        %758 = vmatpush1.bf16.msra.mxu0 %v687
        %759 = vmatprep.subr.bf16.mxu0 %v686
        %760 = vmatpush1.bf16.msra.mxu0 %v685
        %761 = vmatprep.subr.bf16.mxu0 %v684
        %762 = vmatpush1.bf16.msra.mxu0 %v683
        %763 = vmatprep.subr.bf16.mxu0 %v714
        %764 = vmatpush2.bf16.msra.mxu0 %v713
        %765 = vmatprep.subr.bf16.mxu0 %v712
        %766 = vmatpush2.bf16.msra.mxu0 %v711
        %767 = vmatprep.subr.bf16.mxu0 %v710
        %768 = vmatpush2.bf16.msra.mxu0 %v709
        %769 = vmatprep.subr.bf16.mxu0 %v708
        %770 = vmatpush2.bf16.msra.mxu0 %v707
        %771 = vmatprep.subr.bf16.mxu0 %v706
        %772 = vmatpush2.bf16.msra.mxu0 %v705
        %773 = vmatprep.subr.bf16.mxu0 %v704
        %774 = vmatpush2.bf16.msra.mxu0 %v703
        %775 = vmatprep.subr.bf16.mxu0 %v702
        %776 = vmatpush2.bf16.msra.mxu0 %v701
        %777 = vmatprep.subr.bf16.mxu0 %v700
        %778 = vmatpush2.bf16.msra.mxu0 %v699
        %779 = vmatprep.mubr.bf16.mxu0 %v541
        %780 = vmatmul.mubr.bf16.gmra.mxu0 %v536
        %v781 = vpop.f32.mrf.mxu0
        %v782 = vadd.f32 %v580, %v781
        %v783 = vpop.f32.mrf.mxu0
        %v784 = vadd.f32 %v584, %v783
        %v785 = vpop.f32.mrf.mxu0
        %v786 = vadd.f32 %v580, %v785
        %v787 = vpop.f32.mrf.mxu0
        %v788 = vadd.f32 %v584, %v787
        %789 = vdwg.mxu0
        %v790 = vld [vmem:[#allocation4] sm:$0xff]
        %v791 = vld [vmem:[#allocation4 + $0x8] sm:$0xff]
        %v792 = vld [vmem:[#allocation4 + $0x10] sm:$0xff]
        %v793 = vld [vmem:[#allocation4 + $0x18] sm:$0xff]
        %v794 = vld [vmem:[#allocation4 + $0x20] sm:$0xff]
        %v795 = vld [vmem:[#allocation4 + $0x28] sm:$0xff]
        %v796 = vld [vmem:[#allocation4 + $0x30] sm:$0xff]
        %v797 = vld [vmem:[#allocation4 + $0x38] sm:$0xff]
        %v798 = vld [vmem:[#allocation4 + $0x40] sm:$0xff]
        %v799 = vld [vmem:[#allocation4 + $0x48] sm:$0xff]
        %v800 = vld [vmem:[#allocation4 + $0x50] sm:$0xff]
        %v801 = vld [vmem:[#allocation4 + $0x58] sm:$0xff]
        %v802 = vld [vmem:[#allocation4 + $0x60] sm:$0xff]
        %v803 = vld [vmem:[#allocation4 + $0x68] sm:$0xff]
        %v804 = vld [vmem:[#allocation4 + $0x70] sm:$0xff]
        %v805 = vld [vmem:[#allocation4 + $0x78] sm:$0xff]
        %v806 = vld [vmem:[#allocation4 + $0x80] sm:$0xff]
        %v807 = vld [vmem:[#allocation4 + $0x88] sm:$0xff]
        %v808 = vld [vmem:[#allocation4 + $0x90] sm:$0xff]
        %v809 = vld [vmem:[#allocation4 + $0x98] sm:$0xff]
        %v810 = vld [vmem:[#allocation4 + $0xa0] sm:$0xff]
        %v811 = vld [vmem:[#allocation4 + $0xa8] sm:$0xff]
        %v812 = vld [vmem:[#allocation4 + $0xb0] sm:$0xff]
        %v813 = vld [vmem:[#allocation4 + $0xb8] sm:$0xff]
        %v814 = vld [vmem:[#allocation4 + $0xc0] sm:$0xff]
        %v815 = vld [vmem:[#allocation4 + $0xc8] sm:$0xff]
        %v816 = vld [vmem:[#allocation4 + $0xd0] sm:$0xff]
        %v817 = vld [vmem:[#allocation4 + $0xd8] sm:$0xff]
        %v818 = vld [vmem:[#allocation4 + $0xe0] sm:$0xff]
        %v819 = vld [vmem:[#allocation4 + $0xe8] sm:$0xff]
        %v820 = vld [vmem:[#allocation4 + $0xf0] sm:$0xff]
        %v821 = vld [vmem:[#allocation4 + $0xf8] sm:$0xff]
        %v822 = vld [vmem:[%s7] sm:$0x3]
        %v824 = vlaneseq
        %v825 = vshrl.u32 %v824, 7
        %v826 = vsub.s32 0, %v825
        %v827 = vrot.slane %v822, %v826
        %v828 = vlaneseq
        %v829 = vshrl.u32 %v828, 7
        %v830 = vsub.s32 1, %v829
        %v831 = vrot.slane %v822, %v830
        %v866 = vunpack.c.l.b16 %v790
        %v867 = vunpack.c.h.b16 %v790
        %v868 = vunpack.c.l.b16 %v791
        %v869 = vunpack.c.h.b16 %v791
        %v870 = vunpack.c.l.b16 %v792
        %v871 = vunpack.c.h.b16 %v792
        %v872 = vunpack.c.l.b16 %v793
        %v873 = vunpack.c.h.b16 %v793
        %v874 = vunpack.c.l.b16 %v794
        %v875 = vunpack.c.h.b16 %v794
        %v876 = vunpack.c.l.b16 %v795
        %v877 = vunpack.c.h.b16 %v795
        %v878 = vunpack.c.l.b16 %v796
        %v879 = vunpack.c.h.b16 %v796
        %v880 = vunpack.c.l.b16 %v797
        %v881 = vunpack.c.h.b16 %v797
        %v882 = vunpack.c.l.b16 %v798
        %v883 = vunpack.c.h.b16 %v798
        %v884 = vunpack.c.l.b16 %v799
        %v885 = vunpack.c.h.b16 %v799
        %v886 = vunpack.c.l.b16 %v800
        %v887 = vunpack.c.h.b16 %v800
        %v888 = vunpack.c.l.b16 %v801
        %v889 = vunpack.c.h.b16 %v801
        %v890 = vunpack.c.l.b16 %v802
        %v891 = vunpack.c.h.b16 %v802
        %v892 = vunpack.c.l.b16 %v803
        %v893 = vunpack.c.h.b16 %v803
        %v894 = vunpack.c.l.b16 %v804
        %v895 = vunpack.c.h.b16 %v804
        %v896 = vunpack.c.l.b16 %v805
        %v897 = vunpack.c.h.b16 %v805
        %v898 = vunpack.c.l.b16 %v806
        %v899 = vunpack.c.h.b16 %v806
        %v900 = vunpack.c.l.b16 %v807
        %v901 = vunpack.c.h.b16 %v807
        %v902 = vunpack.c.l.b16 %v808
        %v903 = vunpack.c.h.b16 %v808
        %v904 = vunpack.c.l.b16 %v809
        %v905 = vunpack.c.h.b16 %v809
        %v906 = vunpack.c.l.b16 %v810
        %v907 = vunpack.c.h.b16 %v810
        %v908 = vunpack.c.l.b16 %v811
        %v909 = vunpack.c.h.b16 %v811
        %v910 = vunpack.c.l.b16 %v812
        %v911 = vunpack.c.h.b16 %v812
        %v912 = vunpack.c.l.b16 %v813
        %v913 = vunpack.c.h.b16 %v813
        %v914 = vunpack.c.l.b16 %v814
        %v915 = vunpack.c.h.b16 %v814
        %v916 = vunpack.c.l.b16 %v815
        %v917 = vunpack.c.h.b16 %v815
        %v918 = vunpack.c.l.b16 %v816
        %v919 = vunpack.c.h.b16 %v816
        %v920 = vunpack.c.l.b16 %v817
        %v921 = vunpack.c.h.b16 %v817
        %v922 = vunpack.c.l.b16 %v818
        %v923 = vunpack.c.h.b16 %v818
        %v924 = vunpack.c.l.b16 %v819
        %v925 = vunpack.c.h.b16 %v819
        %v926 = vunpack.c.l.b16 %v820
        %v927 = vunpack.c.h.b16 %v820
        %v928 = vunpack.c.l.b16 %v821
        %v929 = vunpack.c.h.b16 %v821
        %v930 = vpack.c.b16 %v868, %v866
        %v931 = vpack.c.b16 %v869, %v867
        %v932 = vpack.c.b16 %v872, %v870
        %v933 = vpack.c.b16 %v873, %v871
        %v934 = vpack.c.b16 %v876, %v874
        %v935 = vpack.c.b16 %v877, %v875
        %v936 = vpack.c.b16 %v880, %v878
        %v937 = vpack.c.b16 %v881, %v879
        %v938 = vpack.c.b16 %v884, %v882
        %v939 = vpack.c.b16 %v885, %v883
        %v940 = vpack.c.b16 %v888, %v886
        %v941 = vpack.c.b16 %v889, %v887
        %v942 = vpack.c.b16 %v892, %v890
        %v943 = vpack.c.b16 %v893, %v891
        %v944 = vpack.c.b16 %v896, %v894
        %v945 = vpack.c.b16 %v897, %v895
        %v946 = vpack.c.b16 %v900, %v898
        %v947 = vpack.c.b16 %v901, %v899
        %v948 = vpack.c.b16 %v904, %v902
        %v949 = vpack.c.b16 %v905, %v903
        %v950 = vpack.c.b16 %v908, %v906
        %v951 = vpack.c.b16 %v909, %v907
        %v952 = vpack.c.b16 %v912, %v910
        %v953 = vpack.c.b16 %v913, %v911
        %v954 = vpack.c.b16 %v916, %v914
        %v955 = vpack.c.b16 %v917, %v915
        %v956 = vpack.c.b16 %v920, %v918
        %v957 = vpack.c.b16 %v921, %v919
        %v958 = vpack.c.b16 %v924, %v922
        %v959 = vpack.c.b16 %v925, %v923
        %v960 = vpack.c.b16 %v928, %v926
        %v961 = vpack.c.b16 %v929, %v927
        %994 = vmatprep.subr.bf16.mxu0 %v945
        %995 = vmatpush1.bf16.msra.mxu0 %v944
        %996 = vmatprep.subr.bf16.mxu0 %v943
        %997 = vmatpush1.bf16.msra.mxu0 %v942
        %998 = vmatprep.subr.bf16.mxu0 %v941
        %999 = vmatpush1.bf16.msra.mxu0 %v940
        %1000 = vmatprep.subr.bf16.mxu0 %v939
        %1001 = vmatpush1.bf16.msra.mxu0 %v938
        %1002 = vmatprep.subr.bf16.mxu0 %v937
        %1003 = vmatpush1.bf16.msra.mxu0 %v936
        %1004 = vmatprep.subr.bf16.mxu0 %v935
        %1005 = vmatpush1.bf16.msra.mxu0 %v934
        %1006 = vmatprep.subr.bf16.mxu0 %v933
        %1007 = vmatpush1.bf16.msra.mxu0 %v932
        %1008 = vmatprep.subr.bf16.mxu0 %v931
        %1009 = vmatpush1.bf16.msra.mxu0 %v930
        %1010 = vmatprep.subr.bf16.mxu0 %v961
        %1011 = vmatpush2.bf16.msra.mxu0 %v960
        %1012 = vmatprep.subr.bf16.mxu0 %v959
        %1013 = vmatpush2.bf16.msra.mxu0 %v958
        %1014 = vmatprep.subr.bf16.mxu0 %v957
        %1015 = vmatpush2.bf16.msra.mxu0 %v956
        %1016 = vmatprep.subr.bf16.mxu0 %v955
        %1017 = vmatpush2.bf16.msra.mxu0 %v954
        %1018 = vmatprep.subr.bf16.mxu0 %v953
        %1019 = vmatpush2.bf16.msra.mxu0 %v952
        %1020 = vmatprep.subr.bf16.mxu0 %v951
        %1021 = vmatpush2.bf16.msra.mxu0 %v950
        %1022 = vmatprep.subr.bf16.mxu0 %v949
        %1023 = vmatpush2.bf16.msra.mxu0 %v948
        %1024 = vmatprep.subr.bf16.mxu0 %v947
        %1025 = vmatpush2.bf16.msra.mxu0 %v946
        %1026 = vmatprep.mubr.bf16.mxu0 %v541
        %1027 = vmatmul.mubr.bf16.gmra.mxu0 %v536
        %v1028 = vpop.f32.mrf.mxu0
        %v1029 = vadd.f32 %v827, %v1028
        %v1030 = vpop.f32.mrf.mxu0
        %v1031 = vadd.f32 %v831, %v1030
        %v1032 = vpop.f32.mrf.mxu0
        %v1033 = vadd.f32 %v827, %v1032
        %v1034 = vpop.f32.mrf.mxu0
        %v1035 = vadd.f32 %v831, %v1034
        %1036 = vdwg.mxu0
        %v1037 = vxor.u32 %v782, 2147483648
        %v1038 = vxor.u32 %v786, 2147483648
        %v1039 = vmul.f32 %v1037, 1.442695
        %v1040 = vpow.pop %v1039
        %v1041 = vmul.f32 %v1038, 1.442695
        %v1042 = vpow.pop %v1041
        %v1043 = vadd.f32 %v1040, 1.0
        %v1044 = vadd.f32 %v1042, 1.0
        %v1045 = vrcp.pop %v1043
        %v1046 = vmul.f32 1.0, %v1045
        %v1047 = vrcp.pop %v1044
        %v1048 = vmul.f32 1.0, %v1047
        %v1049 = vxor.u32 %v784, 2147483648
        %v1050 = vxor.u32 %v788, 2147483648
        %v1051 = vmul.f32 %v1049, 1.442695
        %v1052 = vpow.pop %v1051
        %v1053 = vmul.f32 %v1050, 1.442695
        %v1054 = vpow.pop %v1053
        %v1055 = vadd.f32 %v1052, 1.0
        %v1056 = vadd.f32 %v1054, 1.0
        %v1057 = vrcp.pop %v1055
        %v1058 = vmul.f32 1.0, %v1057
        %v1059 = vrcp.pop %v1056
        %v1060 = vmul.f32 1.0, %v1059
        %v1061 = vmul.f32 %v1046, %v1031
        %v1062 = vmul.f32 %v1048, %v1035
        %v1063 = vadd.f32 %v1029, %v1061
        %v1064 = vadd.f32 %v1033, %v1062
        %v1065 = vtanh.pop %v1063
        %v1066 = vtanh.pop %v1064
        %v1067 = vsub.f32 1.0, %v1058
        %v1068 = vsub.f32 1.0, %v1060
        %v1069 = vmul.f32 %v1067, %v1065
        %v1070 = vmul.f32 %v1068, %v1066
        %v1071 = vunpack.c.l.bf16 %v459
        %v1072 = vunpack.c.l.bf16 %v460
        %v1073 = vmul.f32 %v1058, %v1071
        %v1074 = vmul.f32 %v1060, %v1072
        %v1075 = vadd.f32 %v1069, %v1073
        %v1076 = vadd.f32 %v1070, %v1074
        %v1077 = vpack.c.bf16 %v1076, %v1075
        %v1078 = vld [vmem:[%s8] sm:$0xf]
        %v1079 = vld [vmem:[%s8 + $0x4] sm:$0xf]
        %v1080 = vld [vmem:[%s8 + $0x8] sm:$0xf]
        %v1081 = vld [vmem:[%s8 + $0xc] sm:$0xf]
        %v1082 = vld [vmem:[%s8 + $0x10] sm:$0xf]
        %v1083 = vld [vmem:[%s8 + $0x14] sm:$0xf]
        %v1084 = vld [vmem:[%s8 + $0x18] sm:$0xf]
        %v1085 = vld [vmem:[%s8 + $0x1c] sm:$0xf]
        %v1086 = vld [vmem:[%s8 + $0x20] sm:$0xf]
        %v1087 = vld [vmem:[%s8 + $0x24] sm:$0xf]
        %v1088 = vld [vmem:[%s8 + $0x28] sm:$0xf]
        %v1089 = vld [vmem:[%s8 + $0x2c] sm:$0xf]
        %v1090 = vld [vmem:[%s8 + $0x30] sm:$0xf]
        %v1091 = vld [vmem:[%s8 + $0x34] sm:$0xf]
        %v1092 = vld [vmem:[%s8 + $0x38] sm:$0xf]
        %v1093 = vld [vmem:[%s8 + $0x3c] sm:$0xf]
        %v1094 = vld [vmem:[%s9] sm:$0x1]
        %v1096 = vlaneseq
        %v1097 = vshrl.u32 %v1096, 7
        %v1098 = vsub.s32 0, %v1097
        %v1099 = vrot.slane %v1094, %v1098
        %v1117 = vunpack.c.l.b16 %v1078
        %v1118 = vunpack.c.l.b16 %v1079
        %v1119 = vunpack.c.l.b16 %v1080
        %v1120 = vunpack.c.l.b16 %v1081
        %v1121 = vunpack.c.l.b16 %v1082
        %v1122 = vunpack.c.l.b16 %v1083
        %v1123 = vunpack.c.l.b16 %v1084
        %v1124 = vunpack.c.l.b16 %v1085
        %v1125 = vunpack.c.l.b16 %v1086
        %v1126 = vunpack.c.l.b16 %v1087
        %v1127 = vunpack.c.l.b16 %v1088
        %v1128 = vunpack.c.l.b16 %v1089
        %v1129 = vunpack.c.l.b16 %v1090
        %v1130 = vunpack.c.l.b16 %v1091
        %v1131 = vunpack.c.l.b16 %v1092
        %v1132 = vunpack.c.l.b16 %v1093
        %v1133 = vpack.c.b16 %v1118, %v1117
        %v1134 = vpack.c.b16 %v1120, %v1119
        %v1135 = vpack.c.b16 %v1122, %v1121
        %v1136 = vpack.c.b16 %v1124, %v1123
        %v1137 = vpack.c.b16 %v1126, %v1125
        %v1138 = vpack.c.b16 %v1128, %v1127
        %v1139 = vpack.c.b16 %v1130, %v1129
        %v1140 = vpack.c.b16 %v1132, %v1131
        %1149 = vmatprep.subr.bf16.mxu0 0
        %1150 = vmatpush1.bf16.msra.mxu0 %v1140
        %1151 = vmatprep.subr.bf16.mxu0 0
        %1152 = vmatpush1.bf16.msra.mxu0 %v1139
        %1153 = vmatprep.subr.bf16.mxu0 0
        %1154 = vmatpush1.bf16.msra.mxu0 %v1138
        %1155 = vmatprep.subr.bf16.mxu0 0
        %1156 = vmatpush1.bf16.msra.mxu0 %v1137
        %1157 = vmatprep.subr.bf16.mxu0 0
        %1158 = vmatpush1.bf16.msra.mxu0 %v1136
        %1159 = vmatprep.subr.bf16.mxu0 0
        %1160 = vmatpush1.bf16.msra.mxu0 %v1135
        %1161 = vmatprep.subr.bf16.mxu0 0
        %1162 = vmatpush1.bf16.msra.mxu0 %v1134
        %1163 = vmatprep.subr.bf16.mxu0 0
        %1164 = vmatpush1.bf16.msra.mxu0 %v1133
        %1165 = vmatprep.subr.bf16.mxu0 0
        %1166 = vmatpush2.bf16.msra.mxu0 0
        %1167 = vmatprep.subr.bf16.mxu0 0
        %1168 = vmatpush2.bf16.msra.mxu0 0
        %1169 = vmatprep.subr.bf16.mxu0 0
        %1170 = vmatpush2.bf16.msra.mxu0 0
        %1171 = vmatprep.subr.bf16.mxu0 0
        %1172 = vmatpush2.bf16.msra.mxu0 0
        %1173 = vmatprep.subr.bf16.mxu0 0
        %1174 = vmatpush2.bf16.msra.mxu0 0
        %1175 = vmatprep.subr.bf16.mxu0 0
        %1176 = vmatpush2.bf16.msra.mxu0 0
        %1177 = vmatprep.subr.bf16.mxu0 0
        %1178 = vmatpush2.bf16.msra.mxu0 0
        %1179 = vmatprep.subr.bf16.mxu0 0
        %1180 = vmatpush2.bf16.msra.mxu0 0
        %1181 = vmatprep.mubr.bf16.mxu0 0
        %1182 = vmatmul.mubr.bf16.gmra.mxu0 %v1077
        %v1183 = vpop.f32.mrf.mxu0
        %v1184 = vadd.f32 %v1099, %v1183
        %v1185 = vpop.f32.mrf.mxu0
        %v1186 = vpop.f32.mrf.mxu0
        %v1187 = vadd.f32 %v1099, %v1186
        %v1188 = vpop.f32.mrf.mxu0
        %1189 = vdwg.mxu0
        %1190 = vst [vmem:[%s448] sm:$0xff] %v1184
        %1191 = vst [vmem:[%s448 + $0x8] sm:$0xff] %v1187
        %v1193 = vunpack.c.l.b16 %v1077
        %v1194 = vunpack.c.h.b16 %v1077
        %v1195 = vpack.c.b16 %v1193, %v1193
        %v1196 = vpack.c.b16 %v1194, %v1194
        %1199 = vst [vmem:[%s454] sm:$0xf] %v1195
        %1200 = vst [vmem:[%s454 + $0x4] sm:$0xf] %v1196
        %s1201 = smul.u32 2, %s25
        %p1202 = scmp.lt.s32.totalorder %s1201, 3
        %s1203 = scalar_select %p1202, %s1201, 3
        %s1204 = smul.addr %s1203, 8
        %s1205 = scalar_lea.vmem %s10, %s1204
        %s1206 = smul.u32 2, %s25
        %p1207 = scmp.lt.s32.totalorder %s1206, 3
        %s1208 = scalar_select %p1207, %s1206, 3
        %s1209 = smul.addr %s1208, 4
        %s1210 = scalar_lea.vmem %s11, %s1209
        // Predicated region
        $region69: #{rnn_forward.1} parent=59 // pred_check
          %p1211 = pneg %p263
        $region70: #{rnn_forward.1} parent=59 // pred_check_branch
          %1213 = sbr.rel (%p1211) target = $region72
        $region71: #{rnn_forward.1} parent=59 // pred_region
          %s1214 = smul.u32 2, %s25
        $region72: #{rnn_forward.1} parent=59 // pred_fallthru
          _
        // Predicated region
        $region73: #{rnn_forward.1} parent=59 // pred_check
          %p1215 = pneg %p289
        $region74: #{rnn_forward.1} parent=59 // pred_check_branch
          %1217 = sbr.rel (%p1215) target = $region76
        $region75: #{rnn_forward.1} parent=59 // pred_region
          %s1218 = smul.u32 2, %s25
        $region76: #{rnn_forward.1} parent=59 // pred_fallthru
          _
      $region60: #{rnn_forward.1} parent=5 // pred_fallthru
        _
      %p1219 = scmp.le.s32.totalorder 2, %s20
      // Predicated region
      $region77: #{rnn_forward.1} parent=5 // pred_check
        %p1220 = pneg %p1219
      $region78: #{rnn_forward.1} parent=5 // pred_check_branch
        %1222 = sbr.rel (%p1220) target = $region80
      $region79: #{rnn_forward.1} parent=5 // pred_region
        %s1223 = ssub.s32 %s20, 2
        // Predicated region
        $region81: #{rnn_forward.1} parent=79 // pred_check
          %p1224 = pneg %p269
        $region82: #{rnn_forward.1} parent=79 // pred_check_branch
          %1226 = sbr.rel (%p1224) target = $region84
        $region83: #{rnn_forward.1} parent=79 // pred_region
          %s1227 = smul.u32 2, %s26
          %p1228 = scmp.lt.s32.totalorder %s1227, 3
          %s1229 = scalar_select %p1228, %s1227, 3
          %s1230 = smul.addr %s1229, 8
          %s1231 = scalar_lea.vmem %s10, %s1230
        $region84: #{rnn_forward.1} parent=79 // pred_fallthru
          _
        // Predicated region
        $region85: #{rnn_forward.1} parent=79 // pred_check
          %p1232 = pneg %p295
        $region86: #{rnn_forward.1} parent=79 // pred_check_branch
          %1234 = sbr.rel (%p1232) target = $region88
        $region87: #{rnn_forward.1} parent=79 // pred_region
          %s1235 = smul.u32 2, %s26
          %p1236 = scmp.lt.s32.totalorder %s1235, 3
          %s1237 = scalar_select %p1236, %s1235, 3
          %s1238 = smul.addr %s1237, 4
          %s1239 = scalar_lea.vmem %s11, %s1238
        $region88: #{rnn_forward.1} parent=79 // pred_fallthru
          _
      $region80: #{rnn_forward.1} parent=5 // pred_fallthru
        _
    $region6: #{rnn_forward.1} parent=1 // loop_footer
      %s24 = sadd.s32 1, %s20
    $region7: #{rnn_forward.1} parent=1 // loop_footer_branch
      %19 = sbr.rel target = $region3
    $region8: #{rnn_forward.1} parent=1 // loop_exit
      _
    %1240 = vsyncpa [#allocation3], 1
    %s1241 = scalar_lea.sflag [#allocation3], 1
    %1242 = vsyncpa %s1241, 1
    %1243 = vsyncpa [#allocation5], 1

</llo_original>
